<compile_context>
chip_gen: v7x
topology: tpu7x:2x2x1
jax: 0.10.0
libtpu: 0.0.40
codegen_flags: <defaults>
</compile_context>

<pallas_src>
import functools

import jax
import jax.numpy as jnp
from jax.experimental import pallas as pl
from jax.experimental.pallas import tpu as pltpu

_TM_CAP = 2048      # batch-tile cap (multiple of 8 and of 16 for bf16 packing)
_NCORES = 2         # partial-sum slots for the norm path (v7x has 2 TensorCores)


def _round_up(x, m):
    return ((x + m - 1) // m) * m


def _cdiv(a, b):
    return -(-a // b)


# ------------------------------ in-kernel compute ------------------------------

def _mlp_layers(x_ref, w1_ref, w23_ref, w4_ref, b123_ref, b4_ref, *,
                in_size, dp_in):
    """4-layer MLP on one (tm, in_size) batch tile -> (tm, dp_out) float32."""
    mm = w1_ref.dtype                       # matmul operand dtype (f32 or bf16)
    x = x_ref[...].astype(mm)               # (tm, in_size)
    if in_size != dp_in:
        # Zero-extend features to the 128-aligned contraction width in VMEM.
        pad = jnp.zeros((x.shape[0], dp_in - in_size), mm)
        x = jnp.concatenate([x, pad], axis=1)
    # Layer 1
    h = jnp.dot(x, w1_ref[...], preferred_element_type=jnp.float32)
    h = jnp.maximum(h + b123_ref[0].astype(jnp.float32), 0.0)
    # Layers 2, 3
    for l in range(2):
        h = jnp.dot(h.astype(mm), w23_ref[l], preferred_element_type=jnp.float32)
        h = jnp.maximum(h + b123_ref[l + 1].astype(jnp.float32), 0.0)
    # Layer 4 (no ReLU)
    h = jnp.dot(h.astype(mm), w4_ref[...], preferred_element_type=jnp.float32)
    return h + b4_ref[...].astype(jnp.float32)       # (tm, dp_out) f32


def _mlp_kernel(x_ref, w1_ref, w23_ref, w4_ref, b123_ref, b4_ref, o_ref, *,
                in_size, dp_in, out_size):
    h = _mlp_layers(x_ref, w1_ref, w23_ref, w4_ref, b123_ref, b4_ref,
                    in_size=in_size, dp_in=dp_in)
    # Narrow to the real output width and fold the dtype cast into the store:
    # the HBM result is exactly (batch, out_size); no wrapper post-processing.
    o_ref[...] = h[:, :out_size].astype(o_ref.dtype)


def _mlp_norm_kernel(x_ref, w1_ref, w23_ref, w4_ref, b123_ref, b4_ref,
                     part_ref, acc_ref, *,
                     in_size, dp_in, tile_m, tiles_per_core, valid_batch):
    # Fused torch.norm (Frobenius) path with per-"core" partial sums.
    c = pl.program_id(0)                    # core / partial-sum slot (parallel)
    i = pl.program_id(1)                    # batch tile within this slot (arbitrary)
    h = _mlp_layers(x_ref, w1_ref, w23_ref, w4_ref, b123_ref, b4_ref,
                    in_size=in_size, dp_in=dp_in)

    # Padded output *columns* are exactly zero by construction (zero weight cols,
    # zero bias, no ReLU on layer 4).  Out-of-range batch *rows* (ragged last tile
    # or duplicated clamped tiles) contain garbage -> mask them out of the sum.
    row0 = (c * tiles_per_core + i) * tile_m
    rows = jax.lax.broadcasted_iota(jnp.int32, h.shape, 0) + row0
    h = jnp.where(rows < valid_batch, h, 0.0)
    ssq = jnp.sum(h * h)

    @pl.when(i == 0)
    def _():
        acc_ref[0] = 0.0

    acc_ref[0] += ssq

    @pl.when(i == pl.num_programs(1) - 1)
    def _():
        part_ref[0, 0] = acc_ref[0]


# --------------------------------- packing -------------------------------------

def pack_mlp_params(params, matmul_dtype=jnp.float32):
    """Pack/pad weights ONCE (outside the per-call path).

    params: dict with w1..w4 stored as (in, out) and b1..b4 as (1, out).
    matmul_dtype: jnp.float32 (default) or jnp.bfloat16 (recommended on v6e/v7x;
    accumulation stays f32 via preferred_element_type).
    """
    in_size = params["w1"].shape[0]
    hidden = params["w2"].shape[0]
    out_size = params["w4"].shape[1]
    dp_in, dp_h, dp_out = (_round_up(d, 128) for d in (in_size, hidden, out_size))
    md = matmul_dtype

    def pad_w(w, r, c):
        return jnp.zeros((r, c), md).at[:w.shape[0], :w.shape[1]].set(w.astype(md))

    def pad_b(b, c):
        b = b.reshape(-1).astype(jnp.float32)
        return jnp.zeros((c,), jnp.float32).at[:b.shape[0]].set(b)

    return dict(
        w1=pad_w(params["w1"], dp_in, dp_h),
        w23=jnp.stack([pad_w(params["w2"], dp_h, dp_h),
                       pad_w(params["w3"], dp_h, dp_h)]),
        w4=pad_w(params["w4"], dp_h, dp_out),
        b123=jnp.stack([pad_b(params["b1"], dp_h),
                        pad_b(params["b2"], dp_h),
                        pad_b(params["b3"], dp_h)]),
        b4=pad_b(params["b4"], dp_out).reshape(1, dp_out),
        meta=dict(in_size=in_size, hidden=hidden, out_size=out_size,
                  dp_in=dp_in, dp_h=dp_h, dp_out=dp_out),
    )


# --------------------------------- wrapper --------------------------------------

def mlp_forward(x, packed, norm_reduce=False, tile_m=None):
    meta = packed["meta"]
    in_size, out_size = meta["in_size"], meta["out_size"]
    dp_in, dp_h, dp_out = meta["dp_in"], meta["dp_h"], meta["dp_out"]
    batch = x.shape[0]
    assert x.shape[1] == in_size
    mm_dtype = packed["w1"].dtype

    # Batch tiling: one full-batch block when it fits under the cap (block dim ==
    # array dim is always legal), otherwise 8/16-aligned tiles of _TM_CAP rows.
    if tile_m is None:
        tm = batch if batch <= _TM_CAP else _TM_CAP
    else:
        assert tile_m % 8 == 0, "tile_m must be a multiple of 8 (16 for bf16)"
        tm = tile_m
    n_tiles = _cdiv(batch, tm)

    # Explicit scoped-VMEM budget (feedback: pre-budget for v7x's 64 MiB physical).
    mm_bytes = jnp.dtype(mm_dtype).itemsize
    w_bytes = ((dp_in * dp_h + 2 * dp_h * dp_h + dp_h * dp_out) * mm_bytes
               + (3 * dp_h + dp_out) * 4)
    stream_bytes = 2 * tm * in_size * x.dtype.itemsize + 2 * tm * out_size * 4
    interm_bytes = 8 * tm * max(dp_in, dp_h, dp_out) * 4
    need = 2 * w_bytes + stream_bytes + interm_bytes
    vmem_limit = int(min(max(need + (8 << 20), 32 << 20), 48 << 20))

    operands = (x, packed["w1"], packed["w23"], packed["w4"],
                packed["b123"], packed["b4"])

    if not norm_reduce:
        # Constant index maps => weight/bias slabs are fetched once and stay
        # resident; only x / out stream through the pipeline.
        in_specs = [
            pl.BlockSpec((tm, in_size), lambda i: (i, 0)),
            pl.BlockSpec((dp_in, dp_h), lambda i: (0, 0)),
            pl.BlockSpec((2, dp_h, dp_h), lambda i: (0, 0, 0)),
            pl.BlockSpec((dp_h, dp_out), lambda i: (0, 0)),
            pl.BlockSpec((3, dp_h), lambda i: (0, 0)),
            pl.BlockSpec((1, dp_out), lambda i: (0, 0)),
        ]
        kernel = functools.partial(_mlp_kernel, in_size=in_size, dp_in=dp_in,
                                   out_size=out_size)
        return pl.pallas_call(
            kernel,
            out_shape=jax.ShapeDtypeStruct((batch, out_size), x.dtype),
            grid=(n_tiles,),
            in_specs=in_specs,
            out_specs=pl.BlockSpec((tm, out_size), lambda i: (i, 0)),
            compiler_params=pltpu.CompilerParams(
                dimension_semantics=("parallel",),   # megacore split on v7x
                vmem_limit_bytes=vmem_limit),
        )(*operands)

    # ---- fused Frobenius-norm path: per-core partial sums, sqrt in wrapper ----
    tpc = _cdiv(n_tiles, _NCORES)            # tiles per partial-sum slot
    last_tile = n_tiles - 1

    def x_map(c, i):
        # Clamp so duplicated "overhang" tiles re-read a valid block; their rows
        # are >= batch and get masked to zero inside the kernel.
        return (jnp.minimum(c * tpc + i, last_tile), 0)

    in_specs = [
        pl.BlockSpec((tm, in_size), x_map),
        pl.BlockSpec((dp_in, dp_h), lambda c, i: (0, 0)),
        pl.BlockSpec((2, dp_h, dp_h), lambda c, i: (0, 0, 0)),
        pl.BlockSpec((dp_h, dp_out), lambda c, i: (0, 0)),
        pl.BlockSpec((3, dp_h), lambda c, i: (0, 0)),
        pl.BlockSpec((1, dp_out), lambda c, i: (0, 0)),
    ]
    kernel = functools.partial(_mlp_norm_kernel, in_size=in_size, dp_in=dp_in,
                               tile_m=tm, tiles_per_core=tpc, valid_batch=batch)
    partials = pl.pallas_call(
        kernel,
        out_shape=jax.ShapeDtypeStruct((_NCORES, 1), jnp.float32),
        grid=(_NCORES, tpc),
        in_specs=in_specs,
        out_specs=pl.BlockSpec((1, 1), lambda c, i: (c, 0),
                               memory_space=pltpu.SMEM),
        scratch_shapes=[pltpu.SMEM((1,), jnp.float32)],
        compiler_params=pltpu.CompilerParams(
            dimension_semantics=("parallel", "arbitrary"),
            vmem_limit_bytes=vmem_limit),
    )(*operands)
    return jnp.sqrt(jnp.sum(partials))       # 0-dim scalar, matching torch.norm


# ------------------------------- param init -------------------------------------

def init_params(key, in_size=10, hidden_dim=32, out_size=1, dtype=jnp.float32):
    """Deterministic init mimicking nn.Linear's U(-1/sqrt(fan_in), 1/sqrt(fan_in))."""
    dims = [(in_size, hidden_dim), (hidden_dim, hidden_dim),
            (hidden_dim, hidden_dim), (hidden_dim, out_size)]
    params = {}
    keys = jax.random.split(key, 2 * len(dims))
    for i, (fan_in, fan_out) in enumerate(dims):
        bound = 1.0 / jnp.sqrt(jnp.float32(fan_in))
        params[f"w{i+1}"] = jax.random.uniform(
            keys[2 * i], (fan_in, fan_out), dtype, -bound, bound)
        params[f"b{i+1}"] = jax.random.uniform(
            keys[2 * i + 1], (1, fan_out), dtype, -bound, bound)
    return params


# ---------------------------- reference & main ----------------------------------

def mlp_reference(x, params, norm_reduce=False):
    h = jnp.maximum(x @ params["w1"] + params["b1"], 0.0)
    h = jnp.maximum(h @ params["w2"] + params["b2"], 0.0)
    h = jnp.maximum(h @ params["w3"] + params["b3"], 0.0)
    out = h @ params["w4"] + params["b4"]
    if norm_reduce:
        return jnp.sqrt(jnp.sum(out * out))
    return out


if __name__ == "__main__":
    key = jax.random.PRNGKey(0)
    pkey, xkey = jax.random.split(key)

    in_size, hidden_dim, out_size, batch = 10, 32, 1, 20
    params = init_params(pkey, in_size, hidden_dim, out_size)
    x = jax.random.normal(xkey, (batch, in_size), jnp.float32)

    packed = pack_mlp_params(params, jnp.float32)      # pack once, reuse per call

    ref = mlp_reference(x, params, norm_reduce=False)
    ref_n = mlp_reference(x, params, norm_reduce=True)

    # Plain forward (f32 matmuls), single full-batch tile.
    out = mlp_forward(x, packed, norm_reduce=False)
    jax.block_until_ready(out)
    assert out.shape == (batch, out_size)
    assert jnp.allclose(out, ref, atol=1e-5, rtol=1e-5)

    # Fused norm_reduce=True path (torch.norm -> Frobenius scalar).
    out_n = mlp_forward(x, packed, norm_reduce=True)
    jax.block_until_ready(out_n)
    assert out_n.ndim == 0
    assert jnp.allclose(out_n, ref_n, atol=1e-4, rtol=1e-5)

    # Multi-tile + ragged last tile (batch=20, tile_m=8 -> 3 tiles, last partial),
    # exercises OOB-row masking and the 2-slot norm split.
    out_t = mlp_forward(x, packed, norm_reduce=False, tile_m=8)
    out_tn = mlp_forward(x, packed, norm_reduce=True, tile_m=8)
    jax.block_until_ready((out_t, out_tn))
    assert jnp.allclose(out_t, ref, atol=1e-5, rtol=1e-5)
    assert jnp.allclose(out_tn, ref_n, atol=1e-4, rtol=1e-5)

    # bf16 matmul operands (v6e/v7x MXU path); f32 accumulation -> loose check.
    packed_bf16 = pack_mlp_params(params, jnp.bfloat16)
    out_bf16 = mlp_forward(x, packed_bf16, norm_reduce=False)
    jax.block_until_ready(out_bf16)
    assert bool(jnp.all(jnp.isfinite(out_bf16)))
    assert jnp.allclose(out_bf16, ref, atol=0.1, rtol=0.2)

    print("KERNEL_OK")
</pallas_src>

<mosaic_0001>
module attributes {stable_mosaic.version = 11 : i64} {
  func.func @_mlp_kernel(%arg0: i32, %arg1: memref<20x10xf32, #tpu.memory_space<vmem>>, %arg2: memref<128x128xf32, #tpu.memory_space<vmem>>, %arg3: memref<2x128x128xf32, #tpu.memory_space<vmem>>, %arg4: memref<128x128xf32, #tpu.memory_space<vmem>>, %arg5: memref<3x128xf32, #tpu.memory_space<vmem>>, %arg6: memref<1x128xf32, #tpu.memory_space<vmem>>, %arg7: memref<20x1xf32, #tpu.memory_space<vmem>>) attributes {dimension_semantics = [#tpu.dimension_semantics<parallel>], iteration_bounds = array<i64: 1>, scalar_prefetch = 0 : i64, scratch_operands = 0 : i64, tpu.core_type = #tpu.core_type<tc>, window_params = [{transform_indices = @transform_0, window_bounds = array<i64: 20, 10>}, {pipeline_mode = #tpu.pipeline_mode<synchronous>, transform_indices = @transform_1, window_bounds = array<i64: 128, 128>}, {pipeline_mode = #tpu.pipeline_mode<synchronous>, transform_indices = @transform_2, window_bounds = array<i64: 2, 128, 128>}, {pipeline_mode = #tpu.pipeline_mode<synchronous>, transform_indices = @transform_3, window_bounds = array<i64: 128, 128>}, {pipeline_mode = #tpu.pipeline_mode<synchronous>, transform_indices = @transform_4, window_bounds = array<i64: 3, 128>}, {pipeline_mode = #tpu.pipeline_mode<synchronous>, transform_indices = @transform_5, window_bounds = array<i64: 1, 128>}, {transform_indices = @transform_6, window_bounds = array<i64: 20, 1>}]} {
    %c0 = arith.constant 0 : index
    %c0_0 = arith.constant 0 : index
    %0 = vector.load %arg1[%c0, %c0_0] : memref<20x10xf32, #tpu.memory_space<vmem>>, vector<20x10xf32>
    %cst = arith.constant 0.000000e+00 : f32
    %1 = vector.broadcast %cst : f32 to vector<20x118xf32>
    %2 = tpu.concatenate %0, %1 in 1 : vector<20x10xf32>, vector<20x118xf32> -> vector<20x128xf32>
    %c0_1 = arith.constant 0 : index
    %c0_2 = arith.constant 0 : index
    %3 = vector.load %arg2[%c0_1, %c0_2] : memref<128x128xf32, #tpu.memory_space<vmem>>, vector<128x128xf32>
    %cst_3 = arith.constant dense<0.000000e+00> : vector<20x128xf32>
    %4 = tpu.matmul %2, %3, %cst_3 {dimension_numbers = #tpu.dot_dimension_numbers<[1], [0], [0], [1], [0, 0, 1, 1], [], []>} : vector<20x128xf32>, vector<128x128xf32>, vector<20x128xf32> -> vector<20x128xf32>
    %c0_4 = arith.constant 0 : index
    %c0_5 = arith.constant 0 : index
    %5 = vector.load %arg5[%c0_4, %c0_5] : memref<3x128xf32, #tpu.memory_space<vmem>>, vector<1x128xf32>
    %6 = vector.shape_cast %5 : vector<1x128xf32> to vector<128xf32>
    %7 = vector.shape_cast %6 : vector<128xf32> to vector<1x128xf32>
    %8 = vector.broadcast %7 : vector<1x128xf32> to vector<20x128xf32>
    %9 = arith.addf %4, %8 : vector<20x128xf32>
    %cst_6 = arith.constant 0.000000e+00 : f32
    %10 = vector.broadcast %cst_6 : f32 to vector<20x128xf32>
    %11 = arith.maximumf %9, %10 : vector<20x128xf32>
    %c0_7 = arith.constant 0 : index
    %c0_8 = arith.constant 0 : index
    %c0_9 = arith.constant 0 : index
    %12 = vector.load %arg3[%c0_7, %c0_8, %c0_9] : memref<2x128x128xf32, #tpu.memory_space<vmem>>, vector<1x128x128xf32>
    %13 = vector.shape_cast %12 : vector<1x128x128xf32> to vector<128x128xf32>
    %cst_10 = arith.constant dense<0.000000e+00> : vector<20x128xf32>
    %14 = tpu.matmul %11, %13, %cst_10 {dimension_numbers = #tpu.dot_dimension_numbers<[1], [0], [0], [1], [0, 0, 1, 1], [], []>} : vector<20x128xf32>, vector<128x128xf32>, vector<20x128xf32> -> vector<20x128xf32>
    %c1 = arith.constant 1 : index
    %c0_11 = arith.constant 0 : index
    %15 = vector.load %arg5[%c1, %c0_11] : memref<3x128xf32, #tpu.memory_space<vmem>>, vector<1x128xf32>
    %16 = vector.shape_cast %15 : vector<1x128xf32> to vector<128xf32>
    %17 = vector.shape_cast %16 : vector<128xf32> to vector<1x128xf32>
    %18 = vector.broadcast %17 : vector<1x128xf32> to vector<20x128xf32>
    %19 = arith.addf %14, %18 : vector<20x128xf32>
    %cst_12 = arith.constant 0.000000e+00 : f32
    %20 = vector.broadcast %cst_12 : f32 to vector<20x128xf32>
    %21 = arith.maximumf %19, %20 : vector<20x128xf32>
    %c1_13 = arith.constant 1 : index
    %c0_14 = arith.constant 0 : index
    %c0_15 = arith.constant 0 : index
    %22 = vector.load %arg3[%c1_13, %c0_14, %c0_15] : memref<2x128x128xf32, #tpu.memory_space<vmem>>, vector<1x128x128xf32>
    %23 = vector.shape_cast %22 : vector<1x128x128xf32> to vector<128x128xf32>
    %cst_16 = arith.constant dense<0.000000e+00> : vector<20x128xf32>
    %24 = tpu.matmul %21, %23, %cst_16 {dimension_numbers = #tpu.dot_dimension_numbers<[1], [0], [0], [1], [0, 0, 1, 1], [], []>} : vector<20x128xf32>, vector<128x128xf32>, vector<20x128xf32> -> vector<20x128xf32>
    %c2 = arith.constant 2 : index
    %c0_17 = arith.constant 0 : index
    %25 = vector.load %arg5[%c2, %c0_17] : memref<3x128xf32, #tpu.memory_space<vmem>>, vector<1x128xf32>
    %26 = vector.shape_cast %25 : vector<1x128xf32> to vector<128xf32>
    %27 = vector.shape_cast %26 : vector<128xf32> to vector<1x128xf32>
    %28 = vector.broadcast %27 : vector<1x128xf32> to vector<20x128xf32>
    %29 = arith.addf %24, %28 : vector<20x128xf32>
    %cst_18 = arith.constant 0.000000e+00 : f32
    %30 = vector.broadcast %cst_18 : f32 to vector<20x128xf32>
    %31 = arith.maximumf %29, %30 : vector<20x128xf32>
    %c0_19 = arith.constant 0 : index
    %c0_20 = arith.constant 0 : index
    %32 = vector.load %arg4[%c0_19, %c0_20] : memref<128x128xf32, #tpu.memory_space<vmem>>, vector<128x128xf32>
    %cst_21 = arith.constant dense<0.000000e+00> : vector<20x128xf32>
    %33 = tpu.matmul %31, %32, %cst_21 {dimension_numbers = #tpu.dot_dimension_numbers<[1], [0], [0], [1], [0, 0, 1, 1], [], []>} : vector<20x128xf32>, vector<128x128xf32>, vector<20x128xf32> -> vector<20x128xf32>
    %c0_22 = arith.constant 0 : index
    %c0_23 = arith.constant 0 : index
    %34 = vector.load %arg6[%c0_22, %c0_23] : memref<1x128xf32, #tpu.memory_space<vmem>>, vector<1x128xf32>
    %35 = vector.broadcast %34 : vector<1x128xf32> to vector<20x128xf32>
    %36 = arith.addf %33, %35 : vector<20x128xf32>
    %37 = vector.extract_strided_slice %36 {offsets = [0, 0], sizes = [20, 1], strides = [1, 1]} : vector<20x128xf32> to vector<20x1xf32>
    %c0_24 = arith.constant 0 : index
    %c0_25 = arith.constant 0 : index
    %38 = vector.load %arg7[%c0_24, %c0_25] : memref<20x1xf32, #tpu.memory_space<vmem>>, vector<20x1xf32>
    tpu.vector_store %arg7[%c0_24, %c0_25], %37 {strides = array<i32>} : memref<20x1xf32, #tpu.memory_space<vmem>>, vector<20x1xf32>,
    return
  }
  func.func @transform_0(%arg0: i32) -> (i32, i32) {
    %c0_i32 = arith.constant 0 : i32
    %c0_i32_0 = arith.constant 0 : i32
    return %arg0, %c0_i32 : i32, i32
  }
  func.func @transform_1(%arg0: i32) -> (i32, i32) {
    %c0_i32 = arith.constant 0 : i32
    %c0_i32_0 = arith.constant 0 : i32
    %c0_i32_1 = arith.constant 0 : i32
    return %c0_i32, %c0_i32_0 : i32, i32
  }
  func.func @transform_2(%arg0: i32) -> (i32, i32, i32) {
    %c0_i32 = arith.constant 0 : i32
    %c0_i32_0 = arith.constant 0 : i32
    %c0_i32_1 = arith.constant 0 : i32
    %c0_i32_2 = arith.constant 0 : i32
    return %c0_i32, %c0_i32_0, %c0_i32_1 : i32, i32, i32
  }
  func.func @transform_3(%arg0: i32) -> (i32, i32) {
    %c0_i32 = arith.constant 0 : i32
    %c0_i32_0 = arith.constant 0 : i32
    %c0_i32_1 = arith.constant 0 : i32
    return %c0_i32, %c0_i32_0 : i32, i32
  }
  func.func @transform_4(%arg0: i32) -> (i32, i32) {
    %c0_i32 = arith.constant 0 : i32
    %c0_i32_0 = arith.constant 0 : i32
    %c0_i32_1 = arith.constant 0 : i32
    return %c0_i32, %c0_i32_0 : i32, i32
  }
  func.func @transform_5(%arg0: i32) -> (i32, i32) {
    %c0_i32 = arith.constant 0 : i32
    %c0_i32_0 = arith.constant 0 : i32
    %c0_i32_1 = arith.constant 0 : i32
    return %c0_i32, %c0_i32_0 : i32, i32
  }
  func.func @transform_6(%arg0: i32) -> (i32, i32) {
    %c0_i32 = arith.constant 0 : i32
    %c0_i32_0 = arith.constant 0 : i32
    return %arg0, %c0_i32 : i32, i32
  }
}

</mosaic_0001>

<llo_original>
// kernel: tpu_custom_call.1
$region0: #{tpu_custom_call.1}
  #allocation0 [shape = 'u32[]', space=smem, size = 0x4, offset = 0x4, fixed_abs, tag = 'smem constant byte address 0x4 - core index']
  #allocation1 [shape = 'u32[144,128]{1,0:T(1,128)}', space=vmem, size = 0x12000, scoped, tag = 'internal scratch']
  %s0 = inlined_call_operand.vmem [shape: f32[20,10], index: 0, kind: input, shape index: {}]
  %s1 = inlined_call_operand.hbm [shape: f32[128,128], index: 1, kind: input, shape index: {}]
  %s2 = inlined_call_operand.hbm [shape: f32[2,128,128], index: 2, kind: input, shape index: {}]
  %s3 = inlined_call_operand.hbm [shape: f32[128,128], index: 3, kind: input, shape index: {}]
  %s4 = inlined_call_operand.vmem [shape: f32[3,128], index: 4, kind: input, shape index: {}]
  %s5 = inlined_call_operand.vmem [shape: f32[1,128], index: 5, kind: input, shape index: {}]
  %s6 = inlined_call_operand.vmem [shape: f32[20,1], index: 6, kind: output, shape index: {}]
  %s7 = sld [smem:[#allocation0]]
  $region46: #{tpu_custom_call.1} parent=0
    _
  %s9 = ssub.s32 1, %s7
  %s10 = scalar_select 0, %s9, %s7
  $region1: #{tpu_custom_call.1} parent=0
    #allocation2 [shape = 'u8[65536]{0}', space=vmem, size = 0x10000, scoped, tag = 'input window, operand 1, single buffered']
    #allocation3 [shape = 's32[1]{0}', space=sflag, size = 0x4, scoped, tag = 'scoped memory for tpu_custom_call.1']
    #allocation4 [shape = 'u8[131072]{0}', space=vmem, size = 0x20000, scoped, tag = 'input window, operand 2, single buffered']
    #allocation5 [shape = 's32[1]{0}', space=sflag, size = 0x4, scoped, tag = 'scoped memory for tpu_custom_call.1']
    #allocation6 [shape = 'u8[65536]{0}', space=vmem, size = 0x10000, scoped, tag = 'input window, operand 3, single buffered']
    %11 = vsyncpa [#allocation3], 0
    %12 = vsyncpa [#allocation5], 0
    // Predicated region
    $region2: #{tpu_custom_call.1} parent=1 // pred_check
      _
    $region3: #{tpu_custom_call.1} parent=1 // pred_check_branch
      %14 = sbr.rel (0) target = $region5
    $region4: #{tpu_custom_call.1} parent=1 // pred_region
      _
    $region5: #{tpu_custom_call.1} parent=1 // pred_fallthru
      _
    // Predicated region
    $region6: #{tpu_custom_call.1} parent=1 // pred_check
      _
    $region7: #{tpu_custom_call.1} parent=1 // pred_check_branch
      %16 = sbr.rel (0) target = $region9
    $region8: #{tpu_custom_call.1} parent=1 // pred_region
      %s18 = ssub.s32 2048, 2048
      %19 = vsyncadd [#allocation3], %s18
      %s20 = sshll.u32 [#allocation2], 4
      %s21 = int_to_ptr.vmem [resolvable:$true] %s20
      %26 = dma.hbm_to_vmem [thread:$0]  %s1, 2048, %s21, [#allocation3], 128, 128, 8
    $region9: #{tpu_custom_call.1} parent=1 // pred_fallthru
      _
    // Predicated region
    $region10: #{tpu_custom_call.1} parent=1 // pred_check
      _
    $region11: #{tpu_custom_call.1} parent=1 // pred_check_branch
      %28 = sbr.rel (0) target = $region13
    $region12: #{tpu_custom_call.1} parent=1 // pred_region
      %s30 = ssub.s32 4096, 4096
      %31 = vsyncadd [#allocation5], %s30
      %s32 = sshll.u32 [#allocation4], 4
      %s33 = int_to_ptr.vmem [resolvable:$true] %s32
      %38 = dma.hbm_to_vmem [thread:$0]  %s2, 4096, %s33, [#allocation5], 128, 128, 8
    $region13: #{tpu_custom_call.1} parent=1 // pred_fallthru
      _
    // Predicated region
    $region14: #{tpu_custom_call.1} parent=1 // pred_check
      _
    $region15: #{tpu_custom_call.1} parent=1 // pred_check_branch
      %40 = sbr.rel (0) target = $region17
    $region16: #{tpu_custom_call.1} parent=1 // pred_region
      %s42 = ssub.s32 2048, 2048
      %43 = vsyncadd [#allocation5], %s42
      %s44 = sshll.u32 [#allocation6], 4
      %s45 = int_to_ptr.vmem [resolvable:$true] %s44
      %50 = dma.hbm_to_vmem [thread:$0]  %s3, 2048, %s45, [#allocation5], 128, 128, 8
    $region17: #{tpu_custom_call.1} parent=1 // pred_fallthru
      _
    // Predicated region
    $region18: #{tpu_custom_call.1} parent=1 // pred_check
      _
    $region19: #{tpu_custom_call.1} parent=1 // pred_check_branch
      %52 = sbr.rel (0) target = $region21
    $region20: #{tpu_custom_call.1} parent=1 // pred_region
      _
    $region21: #{tpu_custom_call.1} parent=1 // pred_fallthru
      _
    // Predicated region
    $region22: #{tpu_custom_call.1} parent=1 // pred_check
      _
    $region23: #{tpu_custom_call.1} parent=1 // pred_check_branch
      %54 = sbr.rel (0) target = $region25
    $region24: #{tpu_custom_call.1} parent=1 // pred_region
      _
    $region25: #{tpu_custom_call.1} parent=1 // pred_fallthru
      _
    // Predicated region
    $region26: #{tpu_custom_call.1} parent=1 // pred_check
      _
    $region27: #{tpu_custom_call.1} parent=1 // pred_check_branch
      %56 = sbr.rel (0) target = $region29
    $region28: #{tpu_custom_call.1} parent=1 // pred_region
      %57 = dma.done [#allocation3], 2048
    $region29: #{tpu_custom_call.1} parent=1 // pred_fallthru
      _
    // Predicated region
    $region30: #{tpu_custom_call.1} parent=1 // pred_check
      _
    $region31: #{tpu_custom_call.1} parent=1 // pred_check_branch
      %59 = sbr.rel (0) target = $region33
    $region32: #{tpu_custom_call.1} parent=1 // pred_region
      %60 = dma.done [#allocation5], 4096
    $region33: #{tpu_custom_call.1} parent=1 // pred_fallthru
      _
    // Predicated region
    $region34: #{tpu_custom_call.1} parent=1 // pred_check
      _
    $region35: #{tpu_custom_call.1} parent=1 // pred_check_branch
      %62 = sbr.rel (0) target = $region37
    $region36: #{tpu_custom_call.1} parent=1 // pred_region
      %63 = dma.done [#allocation5], 2048
    $region37: #{tpu_custom_call.1} parent=1 // pred_fallthru
      _
    %v64 = vld [vmem:[%s0] sm:$0xff]
    %v65 = vld [vmem:[%s0 + $0x8] sm:$0xff]
    %v66 = vld [vmem:[%s0 + $0x10] sm:$0xf]
    %vm67 = vcmask 80896
    %v68 = vsel %vm67, %v64, 0.0
    %v69 = vsel %vm67, %v65, 0.0
    %v70 = vsel %vm67, %v66, 0.0
    %v71 = vld [vmem:[#allocation2] sm:$0xff]
    %v72 = vld [vmem:[#allocation2 + $0x8] sm:$0xff]
    %v73 = vld [vmem:[#allocation2 + $0x10] sm:$0xff]
    %v74 = vld [vmem:[#allocation2 + $0x18] sm:$0xff]
    %v75 = vld [vmem:[#allocation2 + $0x20] sm:$0xff]
    %v76 = vld [vmem:[#allocation2 + $0x28] sm:$0xff]
    %v77 = vld [vmem:[#allocation2 + $0x30] sm:$0xff]
    %v78 = vld [vmem:[#allocation2 + $0x38] sm:$0xff]
    %v79 = vld [vmem:[#allocation2 + $0x40] sm:$0xff]
    %v80 = vld [vmem:[#allocation2 + $0x48] sm:$0xff]
    %v81 = vld [vmem:[#allocation2 + $0x50] sm:$0xff]
    %v82 = vld [vmem:[#allocation2 + $0x58] sm:$0xff]
    %v83 = vld [vmem:[#allocation2 + $0x60] sm:$0xff]
    %v84 = vld [vmem:[#allocation2 + $0x68] sm:$0xff]
    %v85 = vld [vmem:[#allocation2 + $0x70] sm:$0xff]
    %v86 = vld [vmem:[#allocation2 + $0x78] sm:$0xff]
    %v87 = vld [vmem:[%s4] sm:$0x1]
    %v88 = vlaneseq
    %v89 = vshrl.u32 %v88, 7
    %v90 = vsub.s32 0, %v89
    %v91 = vrot.slane %v87, %v90
    %92 = vmatprep.subr.mxu0 0.0
    %93 = vmatpush1.msra.mxu0 %v71
    %94 = vmatprep.subr.mxu0 0.0
    %95 = vmatpush1.msra.mxu0 %v72
    %96 = vmatprep.subr.mxu0 0.0
    %97 = vmatpush1.msra.mxu0 %v73
    %98 = vmatprep.subr.mxu0 0.0
    %99 = vmatpush1.msra.mxu0 %v74
    %100 = vmatprep.subr.mxu0 0.0
    %101 = vmatpush1.msra.mxu0 %v75
    %102 = vmatprep.subr.mxu0 0.0
    %103 = vmatpush1.msra.mxu0 %v76
    %104 = vmatprep.subr.mxu0 0.0
    %105 = vmatpush1.msra.mxu0 %v77
    %106 = vmatprep.subr.mxu0 0.0
    %107 = vmatpush1.msra.mxu0 %v78
    %108 = vmatprep.subr.mxu0 0.0
    %109 = vmatpush1.msra.mxu0 %v79
    %110 = vmatprep.subr.mxu0 0.0
    %111 = vmatpush1.msra.mxu0 %v80
    %112 = vmatprep.subr.mxu0 0.0
    %113 = vmatpush1.msra.mxu0 %v81
    %114 = vmatprep.subr.mxu0 0.0
    %115 = vmatpush1.msra.mxu0 %v82
    %116 = vmatprep.subr.mxu0 0.0
    %117 = vmatpush1.msra.mxu0 %v83
    %118 = vmatprep.subr.mxu0 0.0
    %119 = vmatpush1.msra.mxu0 %v84
    %120 = vmatprep.subr.mxu0 0.0
    %121 = vmatpush1.msra.mxu0 %v85
    %122 = vmatprep.subr.mxu0 0.0
    %123 = vmatpush1.msra.mxu0 %v86
    %124 = vmatprep.subr.mxu0 0.0
    %125 = vmatpush1.msra.mxu0 0.0
    %126 = vmatprep.subr.mxu0 0.0
    %127 = vmatpush1.msra.mxu0 0.0
    %128 = vmatprep.subr.mxu0 0.0
    %129 = vmatpush1.msra.mxu0 0.0
    %130 = vmatprep.subr.mxu0 0.0
    %131 = vmatpush1.msra.mxu0 0.0
    %132 = vmatprep.subr.mxu0 0.0
    %133 = vmatpush1.msra.mxu0 0.0
    %134 = vmatprep.subr.mxu0 0.0
    %135 = vmatpush1.msra.mxu0 0.0
    %136 = vmatprep.subr.mxu0 0.0
    %137 = vmatpush1.msra.mxu0 0.0
    %138 = vmatprep.subr.mxu0 0.0
    %139 = vmatpush1.msra.mxu0 0.0
    %140 = vmatprep.subr.mxu0 0.0
    %141 = vmatpush1.msra.mxu0 0.0
    %142 = vmatprep.subr.mxu0 0.0
    %143 = vmatpush1.msra.mxu0 0.0
    %144 = vmatprep.subr.mxu0 0.0
    %145 = vmatpush1.msra.mxu0 0.0
    %146 = vmatprep.subr.mxu0 0.0
    %147 = vmatpush1.msra.mxu0 0.0
    %148 = vmatprep.subr.mxu0 0.0
    %149 = vmatpush1.msra.mxu0 0.0
    %150 = vmatprep.subr.mxu0 0.0
    %151 = vmatpush1.msra.mxu0 0.0
    %152 = vmatprep.subr.mxu0 0.0
    %153 = vmatpush1.msra.mxu0 0.0
    %154 = vmatprep.subr.mxu0 0.0
    %155 = vmatpush1.msra.mxu0 0.0
    %156 = vmatprep.mubr.f32.mxu0 0.0
    %157 = vmatmul.mubr.f32.gmra.mrb[0].mxu0 %v68
    %v158 = vpop.f32.mrb[0].mxu0
    %v159 = vadd.f32 %v91, %v158
    %v160 = vpop.f32.mrb[0].mxu0
    %161 = vmatprep.mubr.f32.mxu0 0.0
    %162 = vmatmul.mubr.f32.gmra.mrb[0].mxu0 %v69
    %v163 = vpop.f32.mrb[0].mxu0
    %v164 = vadd.f32 %v91, %v163
    %v165 = vpop.f32.mrb[0].mxu0
    %166 = vmatprep.mubr.f32.mxu0 0.0
    %167 = vmatmul.mubr.f32.gmra.mrb[0].mxu0 %v70
    %v168 = vpop.f32.mrb[0].mxu0
    %v169 = vadd.f32 %v91, %v168
    %v170 = vpop.f32.mrb[0].mxu0
    %171 = vdwg.mxu0
    %v172 = vmax.f32 %v159, 0.0
    %v173 = vmax.f32 %v164, 0.0
    %v174 = vmax.f32 %v169, 0.0
    %v175 = vld [vmem:[#allocation4] sm:$0xff]
    %v176 = vld [vmem:[#allocation4 + $0x8] sm:$0xff]
    %v177 = vld [vmem:[#allocation4 + $0x10] sm:$0xff]
    %v178 = vld [vmem:[#allocation4 + $0x18] sm:$0xff]
    %v179 = vld [vmem:[#allocation4 + $0x20] sm:$0xff]
    %v180 = vld [vmem:[#allocation4 + $0x28] sm:$0xff]
    %v181 = vld [vmem:[#allocation4 + $0x30] sm:$0xff]
    %v182 = vld [vmem:[#allocation4 + $0x38] sm:$0xff]
    %v183 = vld [vmem:[#allocation4 + $0x40] sm:$0xff]
    %v184 = vld [vmem:[#allocation4 + $0x48] sm:$0xff]
    %v185 = vld [vmem:[#allocation4 + $0x50] sm:$0xff]
    %v186 = vld [vmem:[#allocation4 + $0x58] sm:$0xff]
    %v187 = vld [vmem:[#allocation4 + $0x60] sm:$0xff]
    %v188 = vld [vmem:[#allocation4 + $0x68] sm:$0xff]
    %v189 = vld [vmem:[#allocation4 + $0x70] sm:$0xff]
    %v190 = vld [vmem:[#allocation4 + $0x78] sm:$0xff]
    %v191 = vld [vmem:[%s4 + $0x1] sm:$0x1]
    %v192 = vlaneseq
    %v193 = vshrl.u32 %v192, 7
    %v194 = vsub.s32 0, %v193
    %v195 = vrot.slane %v191, %v194
    %196 = vmatprep.subr.mxu0 0.0
    %197 = vmatpush1.msra.mxu0 %v175
    %198 = vmatprep.subr.mxu0 0.0
    %199 = vmatpush1.msra.mxu0 %v176
    %200 = vmatprep.subr.mxu0 0.0
    %201 = vmatpush1.msra.mxu0 %v177
    %202 = vmatprep.subr.mxu0 0.0
    %203 = vmatpush1.msra.mxu0 %v178
    %204 = vmatprep.subr.mxu0 0.0
    %205 = vmatpush1.msra.mxu0 %v179
    %206 = vmatprep.subr.mxu0 0.0
    %207 = vmatpush1.msra.mxu0 %v180
    %208 = vmatprep.subr.mxu0 0.0
    %209 = vmatpush1.msra.mxu0 %v181
    %210 = vmatprep.subr.mxu0 0.0
    %211 = vmatpush1.msra.mxu0 %v182
    %212 = vmatprep.subr.mxu0 0.0
    %213 = vmatpush1.msra.mxu0 %v183
    %214 = vmatprep.subr.mxu0 0.0
    %215 = vmatpush1.msra.mxu0 %v184
    %216 = vmatprep.subr.mxu0 0.0
    %217 = vmatpush1.msra.mxu0 %v185
    %218 = vmatprep.subr.mxu0 0.0
    %219 = vmatpush1.msra.mxu0 %v186
    %220 = vmatprep.subr.mxu0 0.0
    %221 = vmatpush1.msra.mxu0 %v187
    %222 = vmatprep.subr.mxu0 0.0
    %223 = vmatpush1.msra.mxu0 %v188
    %224 = vmatprep.subr.mxu0 0.0
    %225 = vmatpush1.msra.mxu0 %v189
    %226 = vmatprep.subr.mxu0 0.0
    %227 = vmatpush1.msra.mxu0 %v190
    %228 = vmatprep.subr.mxu0 0.0
    %229 = vmatpush1.msra.mxu0 0.0
    %230 = vmatprep.subr.mxu0 0.0
    %231 = vmatpush1.msra.mxu0 0.0
    %232 = vmatprep.subr.mxu0 0.0
    %233 = vmatpush1.msra.mxu0 0.0
    %234 = vmatprep.subr.mxu0 0.0
    %235 = vmatpush1.msra.mxu0 0.0
    %236 = vmatprep.subr.mxu0 0.0
    %237 = vmatpush1.msra.mxu0 0.0
    %238 = vmatprep.subr.mxu0 0.0
    %239 = vmatpush1.msra.mxu0 0.0
    %240 = vmatprep.subr.mxu0 0.0
    %241 = vmatpush1.msra.mxu0 0.0
    %242 = vmatprep.subr.mxu0 0.0
    %243 = vmatpush1.msra.mxu0 0.0
    %244 = vmatprep.subr.mxu0 0.0
    %245 = vmatpush1.msra.mxu0 0.0
    %246 = vmatprep.subr.mxu0 0.0
    %247 = vmatpush1.msra.mxu0 0.0
    %248 = vmatprep.subr.mxu0 0.0
    %249 = vmatpush1.msra.mxu0 0.0
    %250 = vmatprep.subr.mxu0 0.0
    %251 = vmatpush1.msra.mxu0 0.0
    %252 = vmatprep.subr.mxu0 0.0
    %253 = vmatpush1.msra.mxu0 0.0
    %254 = vmatprep.subr.mxu0 0.0
    %255 = vmatpush1.msra.mxu0 0.0
    %256 = vmatprep.subr.mxu0 0.0
    %257 = vmatpush1.msra.mxu0 0.0
    %258 = vmatprep.subr.mxu0 0.0
    %259 = vmatpush1.msra.mxu0 0.0
    %260 = vmatprep.mubr.f32.mxu0 0.0
    %261 = vmatmul.mubr.f32.gmra.mrb[0].mxu0 %v172
    %v262 = vpop.f32.mrb[0].mxu0
    %v263 = vadd.f32 %v195, %v262
    %v264 = vpop.f32.mrb[0].mxu0
    %265 = vmatprep.mubr.f32.mxu0 0.0
    %266 = vmatmul.mubr.f32.gmra.mrb[0].mxu0 %v173
    %v267 = vpop.f32.mrb[0].mxu0
    %v268 = vadd.f32 %v195, %v267
    %v269 = vpop.f32.mrb[0].mxu0
    %270 = vmatprep.mubr.f32.mxu0 0.0
    %271 = vmatmul.mubr.f32.gmra.mrb[0].mxu0 %v174
    %v272 = vpop.f32.mrb[0].mxu0
    %v273 = vadd.f32 %v195, %v272
    %v274 = vpop.f32.mrb[0].mxu0
    %275 = vdwg.mxu0
    %v276 = vmax.f32 %v263, 0.0
    %v277 = vmax.f32 %v268, 0.0
    %v278 = vmax.f32 %v273, 0.0
    %s279 = scalar_lea.vmem [#allocation4], 128
    %v280 = vld [vmem:[%s279] sm:$0xff]
    %v281 = vld [vmem:[%s279 + $0x8] sm:$0xff]
    %v282 = vld [vmem:[%s279 + $0x10] sm:$0xff]
    %v283 = vld [vmem:[%s279 + $0x18] sm:$0xff]
    %v284 = vld [vmem:[%s279 + $0x20] sm:$0xff]
    %v285 = vld [vmem:[%s279 + $0x28] sm:$0xff]
    %v286 = vld [vmem:[%s279 + $0x30] sm:$0xff]
    %v287 = vld [vmem:[%s279 + $0x38] sm:$0xff]
    %v288 = vld [vmem:[%s279 + $0x40] sm:$0xff]
    %v289 = vld [vmem:[%s279 + $0x48] sm:$0xff]
    %v290 = vld [vmem:[%s279 + $0x50] sm:$0xff]
    %v291 = vld [vmem:[%s279 + $0x58] sm:$0xff]
    %v292 = vld [vmem:[%s279 + $0x60] sm:$0xff]
    %v293 = vld [vmem:[%s279 + $0x68] sm:$0xff]
    %v294 = vld [vmem:[%s279 + $0x70] sm:$0xff]
    %v295 = vld [vmem:[%s279 + $0x78] sm:$0xff]
    %v296 = vld [vmem:[%s4 + $0x2] sm:$0x1]
    %v297 = vlaneseq
    %v298 = vshrl.u32 %v297, 7
    %v299 = vsub.s32 0, %v298
    %v300 = vrot.slane %v296, %v299
    %301 = vmatprep.subr.mxu0 0.0
    %302 = vmatpush1.msra.mxu0 %v280
    %303 = vmatprep.subr.mxu0 0.0
    %304 = vmatpush1.msra.mxu0 %v281
    %305 = vmatprep.subr.mxu0 0.0
    %306 = vmatpush1.msra.mxu0 %v282
    %307 = vmatprep.subr.mxu0 0.0
    %308 = vmatpush1.msra.mxu0 %v283
    %309 = vmatprep.subr.mxu0 0.0
    %310 = vmatpush1.msra.mxu0 %v284
    %311 = vmatprep.subr.mxu0 0.0
    %312 = vmatpush1.msra.mxu0 %v285
    %313 = vmatprep.subr.mxu0 0.0
    %314 = vmatpush1.msra.mxu0 %v286
    %315 = vmatprep.subr.mxu0 0.0
    %316 = vmatpush1.msra.mxu0 %v287
    %317 = vmatprep.subr.mxu0 0.0
    %318 = vmatpush1.msra.mxu0 %v288
    %319 = vmatprep.subr.mxu0 0.0
    %320 = vmatpush1.msra.mxu0 %v289
    %321 = vmatprep.subr.mxu0 0.0
    %322 = vmatpush1.msra.mxu0 %v290
    %323 = vmatprep.subr.mxu0 0.0
    %324 = vmatpush1.msra.mxu0 %v291
    %325 = vmatprep.subr.mxu0 0.0
    %326 = vmatpush1.msra.mxu0 %v292
    %327 = vmatprep.subr.mxu0 0.0
    %328 = vmatpush1.msra.mxu0 %v293
    %329 = vmatprep.subr.mxu0 0.0
    %330 = vmatpush1.msra.mxu0 %v294
    %331 = vmatprep.subr.mxu0 0.0
    %332 = vmatpush1.msra.mxu0 %v295
    %333 = vmatprep.subr.mxu0 0.0
    %334 = vmatpush1.msra.mxu0 0.0
    %335 = vmatprep.subr.mxu0 0.0
    %336 = vmatpush1.msra.mxu0 0.0
    %337 = vmatprep.subr.mxu0 0.0
    %338 = vmatpush1.msra.mxu0 0.0
    %339 = vmatprep.subr.mxu0 0.0
    %340 = vmatpush1.msra.mxu0 0.0
    %341 = vmatprep.subr.mxu0 0.0
    %342 = vmatpush1.msra.mxu0 0.0
    %343 = vmatprep.subr.mxu0 0.0
    %344 = vmatpush1.msra.mxu0 0.0
    %345 = vmatprep.subr.mxu0 0.0
    %346 = vmatpush1.msra.mxu0 0.0
    %347 = vmatprep.subr.mxu0 0.0
    %348 = vmatpush1.msra.mxu0 0.0
    %349 = vmatprep.subr.mxu0 0.0
    %350 = vmatpush1.msra.mxu0 0.0
    %351 = vmatprep.subr.mxu0 0.0
    %352 = vmatpush1.msra.mxu0 0.0
    %353 = vmatprep.subr.mxu0 0.0
    %354 = vmatpush1.msra.mxu0 0.0
    %355 = vmatprep.subr.mxu0 0.0
    %356 = vmatpush1.msra.mxu0 0.0
    %357 = vmatprep.subr.mxu0 0.0
    %358 = vmatpush1.msra.mxu0 0.0
    %359 = vmatprep.subr.mxu0 0.0
    %360 = vmatpush1.msra.mxu0 0.0
    %361 = vmatprep.subr.mxu0 0.0
    %362 = vmatpush1.msra.mxu0 0.0
    %363 = vmatprep.subr.mxu0 0.0
    %364 = vmatpush1.msra.mxu0 0.0
    %365 = vmatprep.mubr.f32.mxu0 0.0
    %366 = vmatmul.mubr.f32.gmra.mrb[0].mxu0 %v276
    %v367 = vpop.f32.mrb[0].mxu0
    %v368 = vadd.f32 %v300, %v367
    %v369 = vpop.f32.mrb[0].mxu0
    %370 = vmatprep.mubr.f32.mxu0 0.0
    %371 = vmatmul.mubr.f32.gmra.mrb[0].mxu0 %v277
    %v372 = vpop.f32.mrb[0].mxu0
    %v373 = vadd.f32 %v300, %v372
    %v374 = vpop.f32.mrb[0].mxu0
    %375 = vmatprep.mubr.f32.mxu0 0.0
    %376 = vmatmul.mubr.f32.gmra.mrb[0].mxu0 %v278
    %v377 = vpop.f32.mrb[0].mxu0
    %v378 = vadd.f32 %v300, %v377
    %v379 = vpop.f32.mrb[0].mxu0
    %380 = vdwg.mxu0
    %v381 = vmax.f32 %v368, 0.0
    %v382 = vmax.f32 %v373, 0.0
    %v383 = vmax.f32 %v378, 0.0
    %v384 = vld [vmem:[#allocation6] sm:$0xff]
    %v385 = vld [vmem:[#allocation6 + $0x8] sm:$0xff]
    %v386 = vld [vmem:[#allocation6 + $0x10] sm:$0xff]
    %v387 = vld [vmem:[#allocation6 + $0x18] sm:$0xff]
    %v388 = vld [vmem:[#allocation6 + $0x20] sm:$0xff]
    %v389 = vld [vmem:[#allocation6 + $0x28] sm:$0xff]
    %v390 = vld [vmem:[#allocation6 + $0x30] sm:$0xff]
    %v391 = vld [vmem:[#allocation6 + $0x38] sm:$0xff]
    %v392 = vld [vmem:[#allocation6 + $0x40] sm:$0xff]
    %v393 = vld [vmem:[#allocation6 + $0x48] sm:$0xff]
    %v394 = vld [vmem:[#allocation6 + $0x50] sm:$0xff]
    %v395 = vld [vmem:[#allocation6 + $0x58] sm:$0xff]
    %v396 = vld [vmem:[#allocation6 + $0x60] sm:$0xff]
    %v397 = vld [vmem:[#allocation6 + $0x68] sm:$0xff]
    %v398 = vld [vmem:[#allocation6 + $0x70] sm:$0xff]
    %v399 = vld [vmem:[#allocation6 + $0x78] sm:$0xff]
    %v400 = vld [vmem:[%s5] sm:$0x1]
    %v402 = vlaneseq
    %v403 = vshrl.u32 %v402, 7
    %v404 = vsub.s32 0, %v403
    %v405 = vrot.slane %v400, %v404
    %407 = vmatprep.subr.mxu0 0.0
    %408 = vmatpush1.msra.mxu0 %v384
    %409 = vmatprep.subr.mxu0 0.0
    %410 = vmatpush1.msra.mxu0 %v385
    %411 = vmatprep.subr.mxu0 0.0
    %412 = vmatpush1.msra.mxu0 %v386
    %413 = vmatprep.subr.mxu0 0.0
    %414 = vmatpush1.msra.mxu0 %v387
    %415 = vmatprep.subr.mxu0 0.0
    %416 = vmatpush1.msra.mxu0 %v388
    %417 = vmatprep.subr.mxu0 0.0
    %418 = vmatpush1.msra.mxu0 %v389
    %419 = vmatprep.subr.mxu0 0.0
    %420 = vmatpush1.msra.mxu0 %v390
    %421 = vmatprep.subr.mxu0 0.0
    %422 = vmatpush1.msra.mxu0 %v391
    %423 = vmatprep.subr.mxu0 0.0
    %424 = vmatpush1.msra.mxu0 %v392
    %425 = vmatprep.subr.mxu0 0.0
    %426 = vmatpush1.msra.mxu0 %v393
    %427 = vmatprep.subr.mxu0 0.0
    %428 = vmatpush1.msra.mxu0 %v394
    %429 = vmatprep.subr.mxu0 0.0
    %430 = vmatpush1.msra.mxu0 %v395
    %431 = vmatprep.subr.mxu0 0.0
    %432 = vmatpush1.msra.mxu0 %v396
    %433 = vmatprep.subr.mxu0 0.0
    %434 = vmatpush1.msra.mxu0 %v397
    %435 = vmatprep.subr.mxu0 0.0
    %436 = vmatpush1.msra.mxu0 %v398
    %437 = vmatprep.subr.mxu0 0.0
    %438 = vmatpush1.msra.mxu0 %v399
    %439 = vmatprep.subr.mxu0 0.0
    %440 = vmatpush1.msra.mxu0 0.0
    %441 = vmatprep.subr.mxu0 0.0
    %442 = vmatpush1.msra.mxu0 0.0
    %443 = vmatprep.subr.mxu0 0.0
    %444 = vmatpush1.msra.mxu0 0.0
    %445 = vmatprep.subr.mxu0 0.0
    %446 = vmatpush1.msra.mxu0 0.0
    %447 = vmatprep.subr.mxu0 0.0
    %448 = vmatpush1.msra.mxu0 0.0
    %449 = vmatprep.subr.mxu0 0.0
    %450 = vmatpush1.msra.mxu0 0.0
    %451 = vmatprep.subr.mxu0 0.0
    %452 = vmatpush1.msra.mxu0 0.0
    %453 = vmatprep.subr.mxu0 0.0
    %454 = vmatpush1.msra.mxu0 0.0
    %455 = vmatprep.subr.mxu0 0.0
    %456 = vmatpush1.msra.mxu0 0.0
    %457 = vmatprep.subr.mxu0 0.0
    %458 = vmatpush1.msra.mxu0 0.0
    %459 = vmatprep.subr.mxu0 0.0
    %460 = vmatpush1.msra.mxu0 0.0
    %461 = vmatprep.subr.mxu0 0.0
    %462 = vmatpush1.msra.mxu0 0.0
    %463 = vmatprep.subr.mxu0 0.0
    %464 = vmatpush1.msra.mxu0 0.0
    %465 = vmatprep.subr.mxu0 0.0
    %466 = vmatpush1.msra.mxu0 0.0
    %467 = vmatprep.subr.mxu0 0.0
    %468 = vmatpush1.msra.mxu0 0.0
    %469 = vmatprep.subr.mxu0 0.0
    %470 = vmatpush1.msra.mxu0 0.0
    %471 = vmatprep.mubr.f32.mxu0 0.0
    %472 = vmatmul.mubr.f32.gmra.mrb[0].mxu0 %v381
    %v473 = vpop.f32.mrb[0].mxu0
    %v474 = vadd.f32 %v405, %v473
    %v475 = vpop.f32.mrb[0].mxu0
    %476 = vmatprep.mubr.f32.mxu0 0.0
    %477 = vmatmul.mubr.f32.gmra.mrb[0].mxu0 %v382
    %v478 = vpop.f32.mrb[0].mxu0
    %v479 = vadd.f32 %v405, %v478
    %v480 = vpop.f32.mrb[0].mxu0
    %481 = vmatprep.mubr.f32.mxu0 0.0
    %482 = vmatmul.mubr.f32.gmra.mrb[0].mxu0 %v383
    %v483 = vpop.f32.mrb[0].mxu0
    %v484 = vadd.f32 %v405, %v483
    %v485 = vpop.f32.mrb[0].mxu0
    %486 = vdwg.mxu0
    %vm487 = vcmask 7168
    %488 = vst.msk [vmem:[%s6] sm:$0xff] %vm487, %v474
    %489 = vst.msk [vmem:[%s6 + $0x8] sm:$0xff] %vm487, %v479
    %vm490 = vcmask 3072
    %491 = vst.msk [vmem:[%s6 + $0x10] sm:$0xf] %vm490, %v484
    // Predicated region
    $region38: #{tpu_custom_call.1} parent=1 // pred_check
      _
    $region39: #{tpu_custom_call.1} parent=1 // pred_check_branch
      %493 = sbr.rel (0) target = $region41
    $region40: #{tpu_custom_call.1} parent=1 // pred_region
      _
    $region41: #{tpu_custom_call.1} parent=1 // pred_fallthru
      _
    // Predicated region
    $region42: #{tpu_custom_call.1} parent=1 // pred_check
      _
    $region43: #{tpu_custom_call.1} parent=1 // pred_check_branch
      %495 = sbr.rel (0) target = $region45
    $region44: #{tpu_custom_call.1} parent=1 // pred_region
      _
    $region45: #{tpu_custom_call.1} parent=1 // pred_fallthru
      _
    %496 = vsyncpa [#allocation3], 1
    %497 = vsyncpa [#allocation5], 1

</llo_original>
